<compile_context>
chip_gen: v7x
topology: tpu7x:2x2x1
jax: 0.10.0
libtpu: 0.0.40
codegen_flags: <defaults>
</compile_context>

<pallas_src>
import math

import jax
import jax.numpy as jnp
from jax.experimental import pallas as pl
from jax.experimental.pallas import tpu as pltpu


def _distmult_tile_kernel(zs_ref, rel_ref, zd_ref, o_ref):
    # zs_ref / rel_ref / zd_ref: (TE, H) VMEM tiles.  o_ref: (TE, 1).
    prod = (zs_ref[...].astype(jnp.float32)
            * rel_ref[...].astype(jnp.float32)
            * zd_ref[...].astype(jnp.float32))
    # Lane (H) reduce on the XLU; keepdims keeps the natural layout.
    o_ref[...] = jnp.sum(prod, axis=1, keepdims=True)


def _round_up(x, m):
    return ((x + m - 1) // m) * m


def distmult_decoder(z, rel_emb, edge_index, edge_type, *, tile_edges=2048):
    """Pallas implementation of DistMultDecoder.forward."""
    _, H = z.shape
    E = int(edge_index.shape[1])

    src = edge_index[0].astype(jnp.int32)
    dst = edge_index[1].astype(jnp.int32)
    etype = edge_type.astype(jnp.int32)

    # Pre-gather the three [E, H] streams (contiguous row gathers via XLA).
    z_src = jnp.take(z, src, axis=0)
    z_dst = jnp.take(z, dst, axis=0)
    rel = jnp.take(rel_emb, etype, axis=0)

    # Sublane granule for the edge axis (8 for f32, 16 for bf16, 32 for int8).
    itemsize = jnp.dtype(z.dtype).itemsize
    sub = max(8, 32 // itemsize)

    # Tile size: big enough to amortize per-step overhead, small enough that
    # 3 double-buffered (TE, H) input tiles stay well inside scoped VMEM,
    # and no larger than the (rounded-up) problem itself.
    vmem_budget = 16 * 1024 * 1024
    max_te = max(sub, (vmem_budget // (3 * 2 * H * itemsize)) // sub * sub)
    TE = min(int(tile_edges), max_te, _round_up(E, sub))
    TE = max(sub, (TE // sub) * sub)

    n_tiles = pl.cdiv(E, TE)
    E_pad = n_tiles * TE
    pad = E_pad - E
    if pad:
        # Zero rows -> zero sums, discarded after the call.
        z_src = jnp.pad(z_src, ((0, pad), (0, 0)))
        z_dst = jnp.pad(z_dst, ((0, pad), (0, 0)))
        rel = jnp.pad(rel, ((0, pad), (0, 0)))

    grid_spec = pltpu.PrefetchScalarGridSpec(
        num_scalar_prefetch=0,
        grid=(n_tiles,),
        in_specs=[
            pl.BlockSpec((TE, H), lambda i: (i, 0)),   # z_src tile
            pl.BlockSpec((TE, H), lambda i: (i, 0)),   # rel tile
            pl.BlockSpec((TE, H), lambda i: (i, 0)),   # z_dst tile
        ],
        out_specs=pl.BlockSpec((TE, 1), lambda i: (i, 0)),
    )

    out = pl.pallas_call(
        _distmult_tile_kernel,
        out_shape=jax.ShapeDtypeStruct((E_pad, 1), jnp.float32),
        grid_spec=grid_spec,
        compiler_params=pltpu.CompilerParams(
            dimension_semantics=("parallel",)),
    )(z_src, rel, z_dst)

    return out[:E, 0]  # -> [E]


def distmult_reference(z, rel_emb, edge_index, edge_type):
    z_src = z[edge_index[0]]
    z_dst = z[edge_index[1]]
    rel = rel_emb[edge_type]
    return jnp.sum(z_src * rel * z_dst, axis=1)


def xavier_uniform(key, shape, dtype=jnp.float32):
    fan_out, fan_in = shape[0], shape[1]
    bound = math.sqrt(6.0 / (fan_in + fan_out))
    return jax.random.uniform(key, shape, dtype=dtype, minval=-bound, maxval=bound)


if __name__ == "__main__":
    # Small, module-consistent shapes.
    num_nodes = 16
    hidden_channels = 128
    num_relations = 4
    num_edges = 8

    key = jax.random.PRNGKey(0)
    k_z, k_rel, k_src, k_dst, k_typ = jax.random.split(key, 5)

    # Node embeddings (would come from the GNN encoder) + module parameters.
    z = jax.random.normal(k_z, (num_nodes, hidden_channels), dtype=jnp.float32)
    rel_emb = xavier_uniform(k_rel, (num_relations, hidden_channels))

    edge_index = jnp.stack([
        jax.random.randint(k_src, (num_edges,), 0, num_nodes),
        jax.random.randint(k_dst, (num_edges,), 0, num_nodes),
    ]).astype(jnp.int32)
    edge_type = jax.random.randint(
        k_typ, (num_edges,), 0, num_relations).astype(jnp.int32)

    out = distmult_decoder(z, rel_emb, edge_index, edge_type)
    out = jax.block_until_ready(out)

    ref = distmult_reference(z, rel_emb, edge_index, edge_type)
    assert out.shape == (num_edges,), out.shape
    assert jnp.allclose(out, ref, atol=1e-3, rtol=1e-3), (out, ref)

    print("KERNEL_OK")
</pallas_src>

<mosaic_0001>
module attributes {stable_mosaic.version = 11 : i64} {
  func.func @_distmult_tile_kernel(%arg0: i32, %arg1: memref<8x128xf32, #tpu.memory_space<vmem>>, %arg2: memref<8x128xf32, #tpu.memory_space<vmem>>, %arg3: memref<8x128xf32, #tpu.memory_space<vmem>>, %arg4: memref<8x1xf32, #tpu.memory_space<vmem>>) attributes {dimension_semantics = [#tpu.dimension_semantics<parallel>], iteration_bounds = array<i64: 1>, scalar_prefetch = 0 : i64, scratch_operands = 0 : i64, tpu.core_type = #tpu.core_type<tc>, window_params = [{transform_indices = @transform_0, window_bounds = array<i64: 8, 128>}, {transform_indices = @transform_1, window_bounds = array<i64: 8, 128>}, {transform_indices = @transform_2, window_bounds = array<i64: 8, 128>}, {transform_indices = @transform_3, window_bounds = array<i64: 8, 1>}]} {
    %c0 = arith.constant 0 : index
    %c0_0 = arith.constant 0 : index
    %0 = vector.load %arg1[%c0, %c0_0] : memref<8x128xf32, #tpu.memory_space<vmem>>, vector<8x128xf32>
    %c0_1 = arith.constant 0 : index
    %c0_2 = arith.constant 0 : index
    %1 = vector.load %arg2[%c0_1, %c0_2] : memref<8x128xf32, #tpu.memory_space<vmem>>, vector<8x128xf32>
    %2 = arith.mulf %0, %1 : vector<8x128xf32>
    %c0_3 = arith.constant 0 : index
    %c0_4 = arith.constant 0 : index
    %3 = vector.load %arg3[%c0_3, %c0_4] : memref<8x128xf32, #tpu.memory_space<vmem>>, vector<8x128xf32>
    %4 = arith.mulf %2, %3 : vector<8x128xf32>
    %cst = arith.constant dense<0.000000e+00> : vector<8xf32>
    %5 = vector.multi_reduction <add>, %4, %cst [1] : vector<8x128xf32> to vector<8xf32>
    %6 = vector.shape_cast %5 : vector<8xf32> to vector<8x1xf32>
    %c0_5 = arith.constant 0 : index
    %c0_6 = arith.constant 0 : index
    %7 = vector.load %arg4[%c0_5, %c0_6] : memref<8x1xf32, #tpu.memory_space<vmem>>, vector<8x1xf32>
    tpu.vector_store %arg4[%c0_5, %c0_6], %6 {strides = array<i32>} : memref<8x1xf32, #tpu.memory_space<vmem>>, vector<8x1xf32>,
    return
  }
  func.func @transform_0(%arg0: i32) -> (i32, i32) {
    %c0_i32 = arith.constant 0 : i32
    %c0_i32_0 = arith.constant 0 : i32
    return %arg0, %c0_i32 : i32, i32
  }
  func.func @transform_1(%arg0: i32) -> (i32, i32) {
    %c0_i32 = arith.constant 0 : i32
    %c0_i32_0 = arith.constant 0 : i32
    return %arg0, %c0_i32 : i32, i32
  }
  func.func @transform_2(%arg0: i32) -> (i32, i32) {
    %c0_i32 = arith.constant 0 : i32
    %c0_i32_0 = arith.constant 0 : i32
    return %arg0, %c0_i32 : i32, i32
  }
  func.func @transform_3(%arg0: i32) -> (i32, i32) {
    %c0_i32 = arith.constant 0 : i32
    %c0_i32_0 = arith.constant 0 : i32
    return %arg0, %c0_i32 : i32, i32
  }
}

</mosaic_0001>

<llo_original>
// kernel: tpu_custom_call.1
$region0: #{tpu_custom_call.1}
  #allocation0 [shape = 'u32[]', space=smem, size = 0x4, offset = 0x4, fixed_abs, tag = 'smem constant byte address 0x4 - core index']
  #allocation1 [shape = 'u32[144,128]{1,0:T(1,128)}', space=vmem, size = 0x12000, scoped, tag = 'internal scratch']
  %s0 = inlined_call_operand.hbm [shape: f32[8,128], index: 0, kind: input, shape index: {}]
  %s1 = inlined_call_operand.hbm [shape: f32[8,128], index: 1, kind: input, shape index: {}]
  %s2 = inlined_call_operand.hbm [shape: f32[8,128], index: 2, kind: input, shape index: {}]
  %s3 = inlined_call_operand.vmem [shape: f32[8,1], index: 3, kind: output, shape index: {}]
  %s4 = sld [smem:[#allocation0]]
  $region34: #{tpu_custom_call.1} parent=0
    _
  %s6 = ssub.s32 1, %s4
  %s7 = scalar_select 0, %s6, %s4
  $region1: #{tpu_custom_call.1} parent=0
    #allocation2 [shape = 'u8[4096]{0}', space=vmem, size = 0x1000, scoped, tag = 'input window, operand 0, single buffered']
    #allocation3 [shape = 's32[1]{0}', space=sflag, size = 0x4, scoped, tag = 'scoped memory for tpu_custom_call.1']
    #allocation4 [shape = 'u8[4096]{0}', space=vmem, size = 0x1000, scoped, tag = 'input window, operand 1, single buffered']
    #allocation5 [shape = 's32[1]{0}', space=sflag, size = 0x4, scoped, tag = 'scoped memory for tpu_custom_call.1']
    #allocation6 [shape = 'u8[4096]{0}', space=vmem, size = 0x1000, scoped, tag = 'input window, operand 2, single buffered']
    %8 = vsyncpa [#allocation3], 0
    %9 = vsyncpa [#allocation5], 0
    // Predicated region
    $region2: #{tpu_custom_call.1} parent=1 // pred_check
      _
    $region3: #{tpu_custom_call.1} parent=1 // pred_check_branch
      %11 = sbr.rel (0) target = $region5
    $region4: #{tpu_custom_call.1} parent=1 // pred_region
      %s13 = ssub.s32 128, 128
      %14 = vsyncadd [#allocation3], %s13
      %s16 = sshll.u32 [#allocation2], 4
      %s17 = int_to_ptr.vmem [resolvable:$true] %s16
      %19 = dma.hbm_to_vmem [thread:$0]  %s0, 128, %s17, [#allocation3]
    $region5: #{tpu_custom_call.1} parent=1 // pred_fallthru
      _
    // Predicated region
    $region6: #{tpu_custom_call.1} parent=1 // pred_check
      _
    $region7: #{tpu_custom_call.1} parent=1 // pred_check_branch
      %21 = sbr.rel (0) target = $region9
    $region8: #{tpu_custom_call.1} parent=1 // pred_region
      %s23 = ssub.s32 128, 128
      %24 = vsyncadd [#allocation5], %s23
      %s26 = sshll.u32 [#allocation4], 4
      %s27 = int_to_ptr.vmem [resolvable:$true] %s26
      %29 = dma.hbm_to_vmem [thread:$0]  %s1, 128, %s27, [#allocation5]
    $region9: #{tpu_custom_call.1} parent=1 // pred_fallthru
      _
    // Predicated region
    $region10: #{tpu_custom_call.1} parent=1 // pred_check
      _
    $region11: #{tpu_custom_call.1} parent=1 // pred_check_branch
      %31 = sbr.rel (0) target = $region13
    $region12: #{tpu_custom_call.1} parent=1 // pred_region
      %s33 = ssub.s32 128, 128
      %34 = vsyncadd [#allocation5], %s33
      %s36 = sshll.u32 [#allocation6], 4
      %s37 = int_to_ptr.vmem [resolvable:$true] %s36
      %39 = dma.hbm_to_vmem [thread:$0]  %s2, 128, %s37, [#allocation5]
    $region13: #{tpu_custom_call.1} parent=1 // pred_fallthru
      _
    // Predicated region
    $region14: #{tpu_custom_call.1} parent=1 // pred_check
      _
    $region15: #{tpu_custom_call.1} parent=1 // pred_check_branch
      %41 = sbr.rel (0) target = $region17
    $region16: #{tpu_custom_call.1} parent=1 // pred_region
      %42 = dma.done [#allocation3], 128
    $region17: #{tpu_custom_call.1} parent=1 // pred_fallthru
      _
    // Predicated region
    $region18: #{tpu_custom_call.1} parent=1 // pred_check
      _
    $region19: #{tpu_custom_call.1} parent=1 // pred_check_branch
      %44 = sbr.rel (0) target = $region21
    $region20: #{tpu_custom_call.1} parent=1 // pred_region
      %45 = dma.done [#allocation5], 128
    $region21: #{tpu_custom_call.1} parent=1 // pred_fallthru
      _
    // Predicated region
    $region22: #{tpu_custom_call.1} parent=1 // pred_check
      _
    $region23: #{tpu_custom_call.1} parent=1 // pred_check_branch
      %47 = sbr.rel (0) target = $region25
    $region24: #{tpu_custom_call.1} parent=1 // pred_region
      %48 = dma.done [#allocation5], 128
    $region25: #{tpu_custom_call.1} parent=1 // pred_fallthru
      _
    %v49 = vld [vmem:[#allocation2] sm:$0xff]
    %v50 = vld [vmem:[#allocation4] sm:$0xff]
    %v51 = vmul.f32 %v49, %v50
    %v52 = vld [vmem:[#allocation6] sm:$0xff]
    %v53 = vmul.f32 %v51, %v52
    %54 = vadd.xlane.f32.xlu0 %v53
    %v55 = vpop.xlane.xlu0 %54
    %vm56 = vcmask 7168
    %57 = vst.msk [vmem:[%s3] sm:$0xff] %vm56, %v55
    // Predicated region
    $region26: #{tpu_custom_call.1} parent=1 // pred_check
      _
    $region27: #{tpu_custom_call.1} parent=1 // pred_check_branch
      %59 = sbr.rel (0) target = $region29
    $region28: #{tpu_custom_call.1} parent=1 // pred_region
      _
    $region29: #{tpu_custom_call.1} parent=1 // pred_fallthru
      _
    // Predicated region
    $region30: #{tpu_custom_call.1} parent=1 // pred_check
      _
    $region31: #{tpu_custom_call.1} parent=1 // pred_check_branch
      %61 = sbr.rel (0) target = $region33
    $region32: #{tpu_custom_call.1} parent=1 // pred_region
      _
    $region33: #{tpu_custom_call.1} parent=1 // pred_fallthru
      _
    %62 = vsyncpa [#allocation3], 1
    %63 = vsyncpa [#allocation5], 1

</llo_original>
